<compile_context>
chip_gen: v6e
topology: v6e:2x2x1
jax: 0.10.0
libtpu: 0.0.40
codegen_flags: <defaults>
</compile_context>

<pallas_src>
import functools

import jax
import jax.numpy as jnp
from jax.experimental import pallas as pl
from jax.experimental.pallas import tpu as pltpu

_HIDDEN = 128
_SUBLANE = 8


def _round_up(x, m):
    return (x + m - 1) // m * m


# ----------------------------- Pallas kernel -------------------------------

def _fused_mlp_kernel(*refs, n_layer):
    """refs = (x_ref, w0, b0, w1, b1, ..., w_{L-1}, b_{L-1}, o_ref).

    x_ref: (TM, F) f32, w_i: (din_i, dout_i) bf16 (VMEM-resident), b_i: (1, dout_i) f32,
    o_ref: (TM, out_dim) f32.  Layers are unrolled (n_layer is small); the
    activation never leaves registers/VMEM.
    """
    x_ref = refs[0]
    o_ref = refs[1 + 2 * n_layer]

    t = x_ref[...].astype(jnp.bfloat16)          # bf16 feeds the MXU
    y = None
    for i in range(n_layer):
        w_ref = refs[1 + 2 * i]
        b_ref = refs[2 + 2 * i]
        # MXU matmul, f32 accumulation; bias / ReLU stay in f32 on the VPU.
        y = jnp.dot(t, w_ref[...], preferred_element_type=jnp.float32)
        y = y + b_ref[...]                        # (1, dout) broadcasts over rows
        if i < n_layer - 1:
            t = jnp.maximum(y, 0.0).astype(jnp.bfloat16)   # ReLU, recast for MXU

    # Numerically-stable softmax over the (unpadded) logits; exact normalization.
    m = jnp.max(y, axis=1, keepdims=True)
    e = jnp.exp(y - m)
    s = jnp.sum(e, axis=1, keepdims=True)
    o_ref[...] = (e / s).astype(o_ref.dtype)


# ------------------------------ MLP wrapper --------------------------------

def init_mlp_params(key, n_layer, input_len, output_len, hidden=_HIDDEN):
    """Parameter init mirroring the module: Linear(input,128), (n_layer-2) x
    Linear(128,128), Linear(128,output).  Weights are stored (in, out) so the
    kernel computes x @ W + b.  Requires n_layer >= 2 (matches the module's
    sensible configurations)."""
    assert n_layer >= 2, "MLP needs at least one hidden linear plus the logits layer"
    dims = [(input_len, hidden)] + [(hidden, hidden)] * (n_layer - 2) + [(hidden, output_len)]
    params = []
    for din, dout in dims:
        key, kw, kb = jax.random.split(key, 3)
        bound = 1.0 / (din ** 0.5)               # PyTorch default Linear init scale
        w = jax.random.uniform(kw, (din, dout), jnp.float32, -bound, bound)
        b = jax.random.uniform(kb, (dout,), jnp.float32, -bound, bound)
        params.append((w, b))
    return params


def prepare_params(params):
    """One-time prep, hoisted OUT of the per-call forward: weights -> bf16 for
    the MXU, biases -> (1, dout) f32 for the VPU.  No padding needed (every
    parameter is passed as a full-array VMEM-resident block)."""
    prepared = []
    for w, b in params:
        prepared.append((jnp.asarray(w, jnp.bfloat16),
                         jnp.asarray(b, jnp.float32).reshape(1, -1)))
    return prepared


def _pick_batch_tile(B):
    if B <= _SUBLANE:
        return B                                  # tiny batch: one full block
    if B >= 1024:
        return 512                                # big batch: ~85% of HBM roofline
    # Mid-size batch: keep >= 2 grid steps so the "parallel" axis shards across
    # v7x's two TensorCores (e.g. B=256 -> TM=128), sublane-aligned.
    return max(_SUBLANE, _round_up((B + 1) // 2, _SUBLANE))


@functools.partial(jax.jit, static_argnames=("n_layer",))
def mlp_forward(x, prepared_params, n_layer):
    # t = input.view(B, -1)
    B = x.shape[0]
    xf = x.reshape(B, -1).astype(jnp.float32)
    F = xf.shape[1]
    out_dim = prepared_params[n_layer - 1][0].shape[1]

    TM = _pick_batch_tile(B)
    grid = (pl.cdiv(B, TM),)                      # partial last block handled by Pallas

    # Input block: full last dim (legal since it equals the array's F), so no
    # lane padding / cast materialization in HBM.
    in_specs = [pl.BlockSpec((TM, F), lambda i: (i, 0))]
    flat_params = []
    for w, b in prepared_params:
        # Full-array blocks with a constant index_map -> weights/biases stay
        # VMEM-resident across the batch grid (no re-DMA per step).
        in_specs.append(pl.BlockSpec(w.shape, lambda i: (0, 0)))
        in_specs.append(pl.BlockSpec(b.shape, lambda i: (0, 0)))
        flat_params += [w, b]
    # Unpadded output block: minimal HBM write stream, no post-call slice.
    out_spec = pl.BlockSpec((TM, out_dim), lambda i: (i, 0))

    param_bytes = sum(w.size * 2 + b.size * 4 for w, b in prepared_params)
    flops = 2 * B * sum(int(w.shape[0]) * int(w.shape[1]) for w, _ in prepared_params)
    bytes_accessed = xf.size * 4 + param_bytes + B * out_dim * 4
    cost = pl.CostEstimate(flops=flops,
                           transcendentals=B * (out_dim + 1),   # exp + divide
                           bytes_accessed=int(bytes_accessed))

    # Raise scoped-VMEM only when the resident blocks would actually need it
    # (conservatively assume double-buffering of every block).
    block_bytes = 2 * (TM * F * 4 + TM * out_dim * 4) + 2 * param_bytes
    extra = {}
    if block_bytes > 24 << 20:
        extra["vmem_limit_bytes"] = int(min(block_bytes + (8 << 20), 120 << 20))

    kernel = functools.partial(_fused_mlp_kernel, n_layer=n_layer)
    return pl.pallas_call(
        kernel,
        out_shape=jax.ShapeDtypeStruct((B, out_dim), jnp.float32),
        grid=grid,
        in_specs=in_specs,
        out_specs=out_spec,
        compiler_params=pltpu.CompilerParams(
            dimension_semantics=("parallel",), **extra),
        cost_estimate=cost,
    )(xf, *flat_params)


# ------------------------------ reference ----------------------------------

def mlp_reference(x, params, n_layer):
    """Pure-JAX reference using the same bf16-matmul / f32-accumulate recipe."""
    B = x.shape[0]
    t = x.reshape(B, -1).astype(jnp.float32)
    y = None
    for i in range(n_layer):
        w, b = params[i]
        y = jnp.dot(t.astype(jnp.bfloat16), jnp.asarray(w, jnp.bfloat16),
                    preferred_element_type=jnp.float32) + b.reshape(1, -1)
        if i < n_layer - 1:
            t = jnp.maximum(y, 0.0)
    return jax.nn.softmax(y, axis=1)


if __name__ == "__main__":
    key = jax.random.PRNGKey(0)
    k_in, k_par = jax.random.split(key)

    # Small shapes implied by the module's forward (anything flattenable to (B, input_len)).
    B, C, L = 2, 4, 16              # input_len = C*L = 64
    n_layer = 3
    input_len = C * L
    output_len = 8

    x = jax.random.normal(k_in, (B, C, L), jnp.float32)
    params = init_mlp_params(k_par, n_layer, input_len, output_len)
    prepared = prepare_params(params)    # one-time weight cast, hoisted out of forward

    out = mlp_forward(x, prepared, n_layer)
    out = jax.block_until_ready(out)

    ref = mlp_reference(x, params, n_layer)
    assert out.shape == (B, output_len)
    assert jnp.allclose(jnp.sum(out, axis=1), 1.0, atol=1e-3)   # exact-ish normalization
    assert jnp.allclose(out, ref, atol=3e-3, rtol=3e-3)         # bf16 MXU feeds

    print("KERNEL_OK")
</pallas_src>

<mosaic_0001>
module attributes {stable_mosaic.version = 11 : i64} {
  func.func @_fused_mlp_kernel(%arg0: i32, %arg1: memref<2x64xf32, #tpu.memory_space<vmem>>, %arg2: memref<64x128xbf16, #tpu.memory_space<vmem>>, %arg3: memref<1x128xf32, #tpu.memory_space<vmem>>, %arg4: memref<128x128xbf16, #tpu.memory_space<vmem>>, %arg5: memref<1x128xf32, #tpu.memory_space<vmem>>, %arg6: memref<128x8xbf16, #tpu.memory_space<vmem>>, %arg7: memref<1x8xf32, #tpu.memory_space<vmem>>, %arg8: memref<2x8xf32, #tpu.memory_space<vmem>>) attributes {dimension_semantics = [#tpu.dimension_semantics<parallel>], iteration_bounds = array<i64: 1>, scalar_prefetch = 0 : i64, scratch_operands = 0 : i64, tpu.core_type = #tpu.core_type<tc>, window_params = [{transform_indices = @transform_0, window_bounds = array<i64: 2, 64>}, {pipeline_mode = #tpu.pipeline_mode<synchronous>, transform_indices = @transform_1, window_bounds = array<i64: 64, 128>}, {pipeline_mode = #tpu.pipeline_mode<synchronous>, transform_indices = @transform_2, window_bounds = array<i64: 1, 128>}, {pipeline_mode = #tpu.pipeline_mode<synchronous>, transform_indices = @transform_3, window_bounds = array<i64: 128, 128>}, {pipeline_mode = #tpu.pipeline_mode<synchronous>, transform_indices = @transform_4, window_bounds = array<i64: 1, 128>}, {pipeline_mode = #tpu.pipeline_mode<synchronous>, transform_indices = @transform_5, window_bounds = array<i64: 128, 8>}, {pipeline_mode = #tpu.pipeline_mode<synchronous>, transform_indices = @transform_6, window_bounds = array<i64: 1, 8>}, {transform_indices = @transform_7, window_bounds = array<i64: 2, 8>}]} {
    %c0 = arith.constant 0 : index
    %c0_0 = arith.constant 0 : index
    %0 = vector.load %arg1[%c0, %c0_0] : memref<2x64xf32, #tpu.memory_space<vmem>>, vector<2x64xf32>
    %1 = arith.truncf %0 : vector<2x64xf32> to vector<2x64xbf16>
    %c0_1 = arith.constant 0 : index
    %c0_2 = arith.constant 0 : index
    %2 = vector.load %arg2[%c0_1, %c0_2] : memref<64x128xbf16, #tpu.memory_space<vmem>>, vector<64x128xbf16>
    %cst = arith.constant dense<0.000000e+00> : vector<2x128xf32>
    %3 = tpu.matmul %1, %2, %cst {dimension_numbers = #tpu.dot_dimension_numbers<[1], [0], [0], [1], [0, 0, 1, 1], [], []>} : vector<2x64xbf16>, vector<64x128xbf16>, vector<2x128xf32> -> vector<2x128xf32>
    %c0_3 = arith.constant 0 : index
    %c0_4 = arith.constant 0 : index
    %4 = vector.load %arg3[%c0_3, %c0_4] : memref<1x128xf32, #tpu.memory_space<vmem>>, vector<1x128xf32>
    %5 = vector.broadcast %4 : vector<1x128xf32> to vector<2x128xf32>
    %6 = arith.addf %3, %5 : vector<2x128xf32>
    %cst_5 = arith.constant 0.000000e+00 : f32
    %7 = vector.broadcast %cst_5 : f32 to vector<2x128xf32>
    %8 = arith.maximumf %6, %7 : vector<2x128xf32>
    %9 = arith.truncf %8 : vector<2x128xf32> to vector<2x128xbf16>
    %c0_6 = arith.constant 0 : index
    %c0_7 = arith.constant 0 : index
    %10 = vector.load %arg4[%c0_6, %c0_7] : memref<128x128xbf16, #tpu.memory_space<vmem>>, vector<128x128xbf16>
    %cst_8 = arith.constant dense<0.000000e+00> : vector<2x128xf32>
    %11 = tpu.matmul %9, %10, %cst_8 {dimension_numbers = #tpu.dot_dimension_numbers<[1], [0], [0], [1], [0, 0, 1, 1], [], []>} : vector<2x128xbf16>, vector<128x128xbf16>, vector<2x128xf32> -> vector<2x128xf32>
    %c0_9 = arith.constant 0 : index
    %c0_10 = arith.constant 0 : index
    %12 = vector.load %arg5[%c0_9, %c0_10] : memref<1x128xf32, #tpu.memory_space<vmem>>, vector<1x128xf32>
    %13 = vector.broadcast %12 : vector<1x128xf32> to vector<2x128xf32>
    %14 = arith.addf %11, %13 : vector<2x128xf32>
    %cst_11 = arith.constant 0.000000e+00 : f32
    %15 = vector.broadcast %cst_11 : f32 to vector<2x128xf32>
    %16 = arith.maximumf %14, %15 : vector<2x128xf32>
    %17 = arith.truncf %16 : vector<2x128xf32> to vector<2x128xbf16>
    %c0_12 = arith.constant 0 : index
    %c0_13 = arith.constant 0 : index
    %18 = vector.load %arg6[%c0_12, %c0_13] : memref<128x8xbf16, #tpu.memory_space<vmem>>, vector<128x8xbf16>
    %cst_14 = arith.constant dense<0.000000e+00> : vector<2x8xf32>
    %19 = tpu.matmul %17, %18, %cst_14 {dimension_numbers = #tpu.dot_dimension_numbers<[1], [0], [0], [1], [0, 0, 1, 1], [], []>} : vector<2x128xbf16>, vector<128x8xbf16>, vector<2x8xf32> -> vector<2x8xf32>
    %c0_15 = arith.constant 0 : index
    %c0_16 = arith.constant 0 : index
    %20 = vector.load %arg7[%c0_15, %c0_16] : memref<1x8xf32, #tpu.memory_space<vmem>>, vector<1x8xf32>
    %21 = vector.broadcast %20 : vector<1x8xf32> to vector<2x8xf32>
    %22 = arith.addf %19, %21 : vector<2x8xf32>
    %cst_17 = arith.constant dense<0xFF800000> : vector<2xf32>
    %23 = vector.multi_reduction <maximumf>, %22, %cst_17 [1] : vector<2x8xf32> to vector<2xf32>
    %24 = vector.shape_cast %23 : vector<2xf32> to vector<2x1xf32>
    %25 = vector.broadcast %24 : vector<2x1xf32> to vector<2x8xf32>
    %26 = arith.subf %22, %25 : vector<2x8xf32>
    %27 = math.exp %26 : vector<2x8xf32>
    %cst_18 = arith.constant dense<0.000000e+00> : vector<2xf32>
    %28 = vector.multi_reduction <add>, %27, %cst_18 [1] : vector<2x8xf32> to vector<2xf32>
    %29 = vector.shape_cast %28 : vector<2xf32> to vector<2x1xf32>
    %30 = vector.broadcast %29 : vector<2x1xf32> to vector<2x8xf32>
    %31 = arith.divf %27, %30 : vector<2x8xf32>
    %c0_19 = arith.constant 0 : index
    %c0_20 = arith.constant 0 : index
    %32 = vector.load %arg8[%c0_19, %c0_20] : memref<2x8xf32, #tpu.memory_space<vmem>>, vector<2x8xf32>
    tpu.vector_store %arg8[%c0_19, %c0_20], %31 {strides = array<i32>} : memref<2x8xf32, #tpu.memory_space<vmem>>, vector<2x8xf32>,
    return
  }
  func.func @transform_0(%arg0: i32) -> (i32, i32) {
    %c0_i32 = arith.constant 0 : i32
    %c0_i32_0 = arith.constant 0 : i32
    return %arg0, %c0_i32 : i32, i32
  }
  func.func @transform_1(%arg0: i32) -> (i32, i32) {
    %c0_i32 = arith.constant 0 : i32
    %c0_i32_0 = arith.constant 0 : i32
    %c0_i32_1 = arith.constant 0 : i32
    return %c0_i32, %c0_i32_0 : i32, i32
  }
  func.func @transform_2(%arg0: i32) -> (i32, i32) {
    %c0_i32 = arith.constant 0 : i32
    %c0_i32_0 = arith.constant 0 : i32
    %c0_i32_1 = arith.constant 0 : i32
    return %c0_i32, %c0_i32_0 : i32, i32
  }
  func.func @transform_3(%arg0: i32) -> (i32, i32) {
    %c0_i32 = arith.constant 0 : i32
    %c0_i32_0 = arith.constant 0 : i32
    %c0_i32_1 = arith.constant 0 : i32
    return %c0_i32, %c0_i32_0 : i32, i32
  }
  func.func @transform_4(%arg0: i32) -> (i32, i32) {
    %c0_i32 = arith.constant 0 : i32
    %c0_i32_0 = arith.constant 0 : i32
    %c0_i32_1 = arith.constant 0 : i32
    return %c0_i32, %c0_i32_0 : i32, i32
  }
  func.func @transform_5(%arg0: i32) -> (i32, i32) {
    %c0_i32 = arith.constant 0 : i32
    %c0_i32_0 = arith.constant 0 : i32
    %c0_i32_1 = arith.constant 0 : i32
    return %c0_i32, %c0_i32_0 : i32, i32
  }
  func.func @transform_6(%arg0: i32) -> (i32, i32) {
    %c0_i32 = arith.constant 0 : i32
    %c0_i32_0 = arith.constant 0 : i32
    %c0_i32_1 = arith.constant 0 : i32
    return %c0_i32, %c0_i32_0 : i32, i32
  }
  func.func @transform_7(%arg0: i32) -> (i32, i32) {
    %c0_i32 = arith.constant 0 : i32
    %c0_i32_0 = arith.constant 0 : i32
    return %arg0, %c0_i32 : i32, i32
  }
}

</mosaic_0001>

<llo_original>
// kernel: mlp_forward.1
$region0: #{mlp_forward.1}
  #allocation0 [shape = 'u32[]', space=smem, size = 0x4, offset = 0x4, fixed_abs, tag = 'smem constant byte address 0x4 - core index']
  #allocation1 [shape = 'u32[144,128]{1,0:T(1,128)}', space=vmem, size = 0x12000, scoped, tag = 'internal scratch']
  %s0 = inlined_call_operand.vmem [shape: f32[2,64], index: 0, kind: input, shape index: {}]
  %s1 = inlined_call_operand.hbm [shape: bf16[64,128], index: 1, kind: input, shape index: {}]
  %s2 = inlined_call_operand.vmem [shape: f32[1,128], index: 2, kind: input, shape index: {}]
  %s3 = inlined_call_operand.vmem [shape: bf16[128,128], index: 3, kind: input, shape index: {}]
  %s4 = inlined_call_operand.vmem [shape: f32[1,128], index: 4, kind: input, shape index: {}]
  %s5 = inlined_call_operand.vmem [shape: bf16[128,8], index: 5, kind: input, shape index: {}]
  %s6 = inlined_call_operand.vmem [shape: f32[1,8], index: 6, kind: input, shape index: {}]
  %s7 = inlined_call_operand.hbm [shape: f32[2,8], index: 7, kind: output, shape index: {}]
  %s8 = sld [smem:[#allocation0]]
  $region42: #{mlp_forward.1} parent=0
    _
  %s10 = ssub.s32 1, %s8
  %s11 = scalar_select 0, %s10, %s8
  $region1: #{mlp_forward.1} parent=0
    #allocation2 [shape = 'u8[16384]{0}', space=vmem, size = 0x4000, scoped, tag = 'input window, operand 1, single buffered']
    #allocation3 [shape = 's32[1]{0}', space=sflag, size = 0x4, scoped, tag = 'scoped memory for mlp_forward.1']
    #allocation4 [shape = 's32[1]{0}', space=sflag, size = 0x4, scoped, tag = 'scoped memory for mlp_forward.1']
    #allocation5 [shape = 'u8[1024]{0}', space=vmem, size = 0x400, scoped, tag = 'output window, operand 0, single buffered']
    %12 = vsyncpa [#allocation3], 0
    %13 = vsyncpa [#allocation4], 0
    // Predicated region
    $region2: #{mlp_forward.1} parent=1 // pred_check
      _
    $region3: #{mlp_forward.1} parent=1 // pred_check_branch
      %15 = sbr.rel (0) target = $region5
    $region4: #{mlp_forward.1} parent=1 // pred_region
      _
    $region5: #{mlp_forward.1} parent=1 // pred_fallthru
      _
    // Predicated region
    $region6: #{mlp_forward.1} parent=1 // pred_check
      _
    $region7: #{mlp_forward.1} parent=1 // pred_check_branch
      %17 = sbr.rel (0) target = $region9
    $region8: #{mlp_forward.1} parent=1 // pred_region
      %s19 = ssub.s32 512, 512
      %20 = vsyncadd [#allocation3], %s19
      %s21 = sshll.u32 [#allocation2], 4
      %s22 = int_to_ptr.vmem [resolvable:$true] %s21
      %27 = dma.hbm_to_vmem [thread:$0]  %s1, 512, %s22, [#allocation3], 64, 64, 4
    $region9: #{mlp_forward.1} parent=1 // pred_fallthru
      _
    // Predicated region
    $region10: #{mlp_forward.1} parent=1 // pred_check
      _
    $region11: #{mlp_forward.1} parent=1 // pred_check_branch
      %29 = sbr.rel (0) target = $region13
    $region12: #{mlp_forward.1} parent=1 // pred_region
      _
    $region13: #{mlp_forward.1} parent=1 // pred_fallthru
      _
    // Predicated region
    $region14: #{mlp_forward.1} parent=1 // pred_check
      _
    $region15: #{mlp_forward.1} parent=1 // pred_check_branch
      %31 = sbr.rel (0) target = $region17
    $region16: #{mlp_forward.1} parent=1 // pred_region
      _
    $region17: #{mlp_forward.1} parent=1 // pred_fallthru
      _
    // Predicated region
    $region18: #{mlp_forward.1} parent=1 // pred_check
      _
    $region19: #{mlp_forward.1} parent=1 // pred_check_branch
      %33 = sbr.rel (0) target = $region21
    $region20: #{mlp_forward.1} parent=1 // pred_region
      _
    $region21: #{mlp_forward.1} parent=1 // pred_fallthru
      _
    // Predicated region
    $region22: #{mlp_forward.1} parent=1 // pred_check
      _
    $region23: #{mlp_forward.1} parent=1 // pred_check_branch
      %35 = sbr.rel (0) target = $region25
    $region24: #{mlp_forward.1} parent=1 // pred_region
      _
    $region25: #{mlp_forward.1} parent=1 // pred_fallthru
      _
    // Predicated region
    $region26: #{mlp_forward.1} parent=1 // pred_check
      _
    $region27: #{mlp_forward.1} parent=1 // pred_check_branch
      %37 = sbr.rel (0) target = $region29
    $region28: #{mlp_forward.1} parent=1 // pred_region
      _
    $region29: #{mlp_forward.1} parent=1 // pred_fallthru
      _
    // Predicated region
    $region30: #{mlp_forward.1} parent=1 // pred_check
      _
    $region31: #{mlp_forward.1} parent=1 // pred_check_branch
      %39 = sbr.rel (0) target = $region33
    $region32: #{mlp_forward.1} parent=1 // pred_region
      %40 = dma.done [#allocation3], 512
    $region33: #{mlp_forward.1} parent=1 // pred_fallthru
      _
    %v42 = vld [vmem:[%s0] sm:$0x3]
    %v43 = vpack.c.bf16 %v42, %v42
    %v44 = vld [vmem:[#allocation2] sm:$0xf]
    %v45 = vld [vmem:[#allocation2 + $0x4] sm:$0xf]
    %v46 = vld [vmem:[#allocation2 + $0x8] sm:$0xf]
    %v47 = vld [vmem:[#allocation2 + $0xc] sm:$0xf]
    %v48 = vld [vmem:[#allocation2 + $0x10] sm:$0xf]
    %v49 = vld [vmem:[#allocation2 + $0x14] sm:$0xf]
    %v50 = vld [vmem:[#allocation2 + $0x18] sm:$0xf]
    %v51 = vld [vmem:[#allocation2 + $0x1c] sm:$0xf]
    %v52 = vld [vmem:[%s2] sm:$0x1]
    %v54 = vlaneseq
    %v55 = vshrl.u32 %v54, 7
    %v56 = vsub.s32 0, %v55
    %v57 = vrot.slane %v52, %v56
    %v67 = vunpack.c.l.b16 %v44
    %v68 = vunpack.c.l.b16 %v45
    %v69 = vunpack.c.l.b16 %v46
    %v70 = vunpack.c.l.b16 %v47
    %v71 = vunpack.c.l.b16 %v48
    %v72 = vunpack.c.l.b16 %v49
    %v73 = vunpack.c.l.b16 %v50
    %v74 = vunpack.c.l.b16 %v51
    %v75 = vpack.c.b16 %v68, %v67
    %v76 = vpack.c.b16 %v70, %v69
    %v77 = vpack.c.b16 %v72, %v71
    %v78 = vpack.c.b16 %v74, %v73
    %vm83 = vcmask 523264
    %v85 = vsel %vm83, %v43, 0
    %87 = vmatprep.subr.bf16.mxu0 0
    %88 = vmatpush1.bf16.msra.mxu0 0
    %89 = vmatprep.subr.bf16.mxu0 0
    %90 = vmatpush1.bf16.msra.mxu0 0
    %91 = vmatprep.subr.bf16.mxu0 0
    %92 = vmatpush1.bf16.msra.mxu0 0
    %93 = vmatprep.subr.bf16.mxu0 0
    %94 = vmatpush1.bf16.msra.mxu0 0
    %95 = vmatprep.subr.bf16.mxu0 0
    %96 = vmatpush1.bf16.msra.mxu0 %v78
    %97 = vmatprep.subr.bf16.mxu0 0
    %98 = vmatpush1.bf16.msra.mxu0 %v77
    %99 = vmatprep.subr.bf16.mxu0 0
    %100 = vmatpush1.bf16.msra.mxu0 %v76
    %101 = vmatprep.subr.bf16.mxu0 0
    %102 = vmatpush1.bf16.msra.mxu0 %v75
    %103 = vmatprep.subr.bf16.mxu0 0
    %104 = vmatpush2.bf16.msra.mxu0 0
    %105 = vmatprep.subr.bf16.mxu0 0
    %106 = vmatpush2.bf16.msra.mxu0 0
    %107 = vmatprep.subr.bf16.mxu0 0
    %108 = vmatpush2.bf16.msra.mxu0 0
    %109 = vmatprep.subr.bf16.mxu0 0
    %110 = vmatpush2.bf16.msra.mxu0 0
    %111 = vmatprep.subr.bf16.mxu0 0
    %112 = vmatpush2.bf16.msra.mxu0 0
    %113 = vmatprep.subr.bf16.mxu0 0
    %114 = vmatpush2.bf16.msra.mxu0 0
    %115 = vmatprep.subr.bf16.mxu0 0
    %116 = vmatpush2.bf16.msra.mxu0 0
    %117 = vmatprep.subr.bf16.mxu0 0
    %118 = vmatpush2.bf16.msra.mxu0 0
    %119 = vmatprep.mubr.bf16.mxu0 0
    %120 = vmatmul.mubr.bf16.gmra.mxu0 %v85
    %v121 = vpop.f32.mrf.mxu0
    %v122 = vadd.f32 %v57, %v121
    %v123 = vpop.f32.mrf.mxu0
    %v124 = vpop.f32.mrf.mxu0
    %v125 = vpop.f32.mrf.mxu0
    %126 = vdwg.mxu0
    %v127 = vmax.f32 %v122, 0.0
    %v128 = vpack.c.bf16 %v127, %v127
    %v129 = vld [vmem:[%s3] sm:$0xf]
    %v130 = vld [vmem:[%s3 + $0x4] sm:$0xf]
    %v131 = vld [vmem:[%s3 + $0x8] sm:$0xf]
    %v132 = vld [vmem:[%s3 + $0xc] sm:$0xf]
    %v133 = vld [vmem:[%s3 + $0x10] sm:$0xf]
    %v134 = vld [vmem:[%s3 + $0x14] sm:$0xf]
    %v135 = vld [vmem:[%s3 + $0x18] sm:$0xf]
    %v136 = vld [vmem:[%s3 + $0x1c] sm:$0xf]
    %v137 = vld [vmem:[%s3 + $0x20] sm:$0xf]
    %v138 = vld [vmem:[%s3 + $0x24] sm:$0xf]
    %v139 = vld [vmem:[%s3 + $0x28] sm:$0xf]
    %v140 = vld [vmem:[%s3 + $0x2c] sm:$0xf]
    %v141 = vld [vmem:[%s3 + $0x30] sm:$0xf]
    %v142 = vld [vmem:[%s3 + $0x34] sm:$0xf]
    %v143 = vld [vmem:[%s3 + $0x38] sm:$0xf]
    %v144 = vld [vmem:[%s3 + $0x3c] sm:$0xf]
    %v145 = vld [vmem:[%s4] sm:$0x1]
    %v147 = vlaneseq
    %v148 = vshrl.u32 %v147, 7
    %v149 = vsub.s32 0, %v148
    %v150 = vrot.slane %v145, %v149
    %v168 = vunpack.c.l.b16 %v129
    %v169 = vunpack.c.l.b16 %v130
    %v170 = vunpack.c.l.b16 %v131
    %v171 = vunpack.c.l.b16 %v132
    %v172 = vunpack.c.l.b16 %v133
    %v173 = vunpack.c.l.b16 %v134
    %v174 = vunpack.c.l.b16 %v135
    %v175 = vunpack.c.l.b16 %v136
    %v176 = vunpack.c.l.b16 %v137
    %v177 = vunpack.c.l.b16 %v138
    %v178 = vunpack.c.l.b16 %v139
    %v179 = vunpack.c.l.b16 %v140
    %v180 = vunpack.c.l.b16 %v141
    %v181 = vunpack.c.l.b16 %v142
    %v182 = vunpack.c.l.b16 %v143
    %v183 = vunpack.c.l.b16 %v144
    %v184 = vpack.c.b16 %v169, %v168
    %v185 = vpack.c.b16 %v171, %v170
    %v186 = vpack.c.b16 %v173, %v172
    %v187 = vpack.c.b16 %v175, %v174
    %v188 = vpack.c.b16 %v177, %v176
    %v189 = vpack.c.b16 %v179, %v178
    %v190 = vpack.c.b16 %v181, %v180
    %v191 = vpack.c.b16 %v183, %v182
    %200 = vmatprep.subr.bf16.mxu0 0
    %201 = vmatpush1.bf16.msra.mxu0 %v191
    %202 = vmatprep.subr.bf16.mxu0 0
    %203 = vmatpush1.bf16.msra.mxu0 %v190
    %204 = vmatprep.subr.bf16.mxu0 0
    %205 = vmatpush1.bf16.msra.mxu0 %v189
    %206 = vmatprep.subr.bf16.mxu0 0
    %207 = vmatpush1.bf16.msra.mxu0 %v188
    %208 = vmatprep.subr.bf16.mxu0 0
    %209 = vmatpush1.bf16.msra.mxu0 %v187
    %210 = vmatprep.subr.bf16.mxu0 0
    %211 = vmatpush1.bf16.msra.mxu0 %v186
    %212 = vmatprep.subr.bf16.mxu0 0
    %213 = vmatpush1.bf16.msra.mxu0 %v185
    %214 = vmatprep.subr.bf16.mxu0 0
    %215 = vmatpush1.bf16.msra.mxu0 %v184
    %216 = vmatprep.subr.bf16.mxu0 0
    %217 = vmatpush2.bf16.msra.mxu0 0
    %218 = vmatprep.subr.bf16.mxu0 0
    %219 = vmatpush2.bf16.msra.mxu0 0
    %220 = vmatprep.subr.bf16.mxu0 0
    %221 = vmatpush2.bf16.msra.mxu0 0
    %222 = vmatprep.subr.bf16.mxu0 0
    %223 = vmatpush2.bf16.msra.mxu0 0
    %224 = vmatprep.subr.bf16.mxu0 0
    %225 = vmatpush2.bf16.msra.mxu0 0
    %226 = vmatprep.subr.bf16.mxu0 0
    %227 = vmatpush2.bf16.msra.mxu0 0
    %228 = vmatprep.subr.bf16.mxu0 0
    %229 = vmatpush2.bf16.msra.mxu0 0
    %230 = vmatprep.subr.bf16.mxu0 0
    %231 = vmatpush2.bf16.msra.mxu0 0
    %232 = vmatprep.mubr.bf16.mxu0 0
    %233 = vmatmul.mubr.bf16.gmra.mxu0 %v128
    %v234 = vpop.f32.mrf.mxu0
    %v235 = vadd.f32 %v150, %v234
    %v236 = vpop.f32.mrf.mxu0
    %v237 = vpop.f32.mrf.mxu0
    %v238 = vpop.f32.mrf.mxu0
    %239 = vdwg.mxu0
    %v240 = vmax.f32 %v235, 0.0
    %v241 = vpack.c.bf16 %v240, %v240
    %v242 = vld [vmem:[%s5] sm:$0xf]
    %v243 = vld [vmem:[%s5 + $0x4] sm:$0xf]
    %v244 = vld [vmem:[%s5 + $0x8] sm:$0xf]
    %v245 = vld [vmem:[%s5 + $0xc] sm:$0xf]
    %v246 = vld [vmem:[%s5 + $0x10] sm:$0xf]
    %v247 = vld [vmem:[%s5 + $0x14] sm:$0xf]
    %v248 = vld [vmem:[%s5 + $0x18] sm:$0xf]
    %v249 = vld [vmem:[%s5 + $0x1c] sm:$0xf]
    %v250 = vld [vmem:[%s5 + $0x20] sm:$0xf]
    %v251 = vld [vmem:[%s5 + $0x24] sm:$0xf]
    %v252 = vld [vmem:[%s5 + $0x28] sm:$0xf]
    %v253 = vld [vmem:[%s5 + $0x2c] sm:$0xf]
    %v254 = vld [vmem:[%s5 + $0x30] sm:$0xf]
    %v255 = vld [vmem:[%s5 + $0x34] sm:$0xf]
    %v256 = vld [vmem:[%s5 + $0x38] sm:$0xf]
    %v257 = vld [vmem:[%s5 + $0x3c] sm:$0xf]
    %v258 = vld [vmem:[%s6] sm:$0x1]
    %v260 = vlaneseq
    %v261 = vshrl.u32 %v260, 7
    %v262 = vsub.s32 0, %v261
    %v263 = vrot.slane %v258, %v262
    %v281 = vunpack.c.l.b16 %v242
    %v282 = vunpack.c.l.b16 %v243
    %v283 = vunpack.c.l.b16 %v244
    %v284 = vunpack.c.l.b16 %v245
    %v285 = vunpack.c.l.b16 %v246
    %v286 = vunpack.c.l.b16 %v247
    %v287 = vunpack.c.l.b16 %v248
    %v288 = vunpack.c.l.b16 %v249
    %v289 = vunpack.c.l.b16 %v250
    %v290 = vunpack.c.l.b16 %v251
    %v291 = vunpack.c.l.b16 %v252
    %v292 = vunpack.c.l.b16 %v253
    %v293 = vunpack.c.l.b16 %v254
    %v294 = vunpack.c.l.b16 %v255
    %v295 = vunpack.c.l.b16 %v256
    %v296 = vunpack.c.l.b16 %v257
    %v297 = vpack.c.b16 %v282, %v281
    %v298 = vpack.c.b16 %v284, %v283
    %v299 = vpack.c.b16 %v286, %v285
    %v300 = vpack.c.b16 %v288, %v287
    %v301 = vpack.c.b16 %v290, %v289
    %v302 = vpack.c.b16 %v292, %v291
    %v303 = vpack.c.b16 %v294, %v293
    %v304 = vpack.c.b16 %v296, %v295
    %313 = vmatprep.subr.bf16.mxu0 0
    %314 = vmatpush1.bf16.msra.mxu0 %v304
    %315 = vmatprep.subr.bf16.mxu0 0
    %316 = vmatpush1.bf16.msra.mxu0 %v303
    %317 = vmatprep.subr.bf16.mxu0 0
    %318 = vmatpush1.bf16.msra.mxu0 %v302
    %319 = vmatprep.subr.bf16.mxu0 0
    %320 = vmatpush1.bf16.msra.mxu0 %v301
    %321 = vmatprep.subr.bf16.mxu0 0
    %322 = vmatpush1.bf16.msra.mxu0 %v300
    %323 = vmatprep.subr.bf16.mxu0 0
    %324 = vmatpush1.bf16.msra.mxu0 %v299
    %325 = vmatprep.subr.bf16.mxu0 0
    %326 = vmatpush1.bf16.msra.mxu0 %v298
    %327 = vmatprep.subr.bf16.mxu0 0
    %328 = vmatpush1.bf16.msra.mxu0 %v297
    %329 = vmatprep.subr.bf16.mxu0 0
    %330 = vmatpush2.bf16.msra.mxu0 0
    %331 = vmatprep.subr.bf16.mxu0 0
    %332 = vmatpush2.bf16.msra.mxu0 0
    %333 = vmatprep.subr.bf16.mxu0 0
    %334 = vmatpush2.bf16.msra.mxu0 0
    %335 = vmatprep.subr.bf16.mxu0 0
    %336 = vmatpush2.bf16.msra.mxu0 0
    %337 = vmatprep.subr.bf16.mxu0 0
    %338 = vmatpush2.bf16.msra.mxu0 0
    %339 = vmatprep.subr.bf16.mxu0 0
    %340 = vmatpush2.bf16.msra.mxu0 0
    %341 = vmatprep.subr.bf16.mxu0 0
    %342 = vmatpush2.bf16.msra.mxu0 0
    %343 = vmatprep.subr.bf16.mxu0 0
    %344 = vmatpush2.bf16.msra.mxu0 0
    %345 = vmatprep.mubr.bf16.mxu0 0
    %346 = vmatmul.mubr.bf16.gmra.mxu0 %v241
    %v347 = vpop.f32.mrf.mxu0
    %v348 = vadd.f32 %v263, %v347
    %v349 = vpop.f32.mrf.mxu0
    %v350 = vpop.f32.mrf.mxu0
    %v351 = vpop.f32.mrf.mxu0
    %352 = vdwg.mxu0
    %vm353 = vcmask 58368
    %v354 = vsel %vm353, %v348, -inf
    %355 = vmax.xlane.f32.xlu0 %v354
    %v356 = vpop.xlane.xlu0 %355
    %v357 = vsub.f32 %v348, %v356
    %v358 = vmul.f32 %v357, 1.442695
    %v359 = vpow.pop %v358
    %v360 = vsel %vm353, %v359, 0.0
    %361 = vadd.xlane.f32.xlu0 %v360
    %v362 = vpop.xlane.xlu0 %361
    %v363 = vrcp.pop %v362
    %v364 = vmul.f32 %v359, %v363
    %365 = vst.msk [vmem:[#allocation5] sm:$0x3] %vm353, %v364
    // Predicated region
    $region34: #{mlp_forward.1} parent=1 // pred_check
      _
    $region35: #{mlp_forward.1} parent=1 // pred_check_branch
      %367 = sbr.rel (0) target = $region37
    $region36: #{mlp_forward.1} parent=1 // pred_region
      %s369 = ssub.s32 32, 32
      %370 = vsyncadd [#allocation4], %s369
      %s372 = sshll.u32 [#allocation5], 4
      %s373 = int_to_ptr.vmem [resolvable:$true] %s372
      %375 = dma.vmem_to_hbm [thread:$0]  %s373, 32, %s7, [#allocation4]
    $region37: #{mlp_forward.1} parent=1 // pred_fallthru
      _
    // Predicated region
    $region38: #{mlp_forward.1} parent=1 // pred_check
      _
    $region39: #{mlp_forward.1} parent=1 // pred_check_branch
      %377 = sbr.rel (0) target = $region41
    $region40: #{mlp_forward.1} parent=1 // pred_region
      %378 = dma.done [#allocation4], 32
    $region41: #{mlp_forward.1} parent=1 // pred_fallthru
      _
    %379 = vsyncpa [#allocation3], 1
    %380 = vsyncpa [#allocation4], 1

</llo_original>
